<compile_context>
chip_gen: v7x
topology: tpu7x:2x2x1
jax: 0.10.0
libtpu: 0.0.40
codegen_flags: <defaults>
</compile_context>

<pallas_src>
import jax
import jax.numpy as jnp
from jax.experimental import pallas as pl
from jax.experimental.pallas import tpu as pltpu

_LANE = 128
_NEG = -1e30  # "-inf" stand-in for class/batch padding: exp() underflows to 0, no inf-inf NaN
_LOGITS_VMEM_BUDGET = 24 * 1024 * 1024  # 2 pipeline buffers of the logits block


def _round_up(x, m):
    return (x + m - 1) // m * m


def _choose_batch_tiling(batch, cp, itemsize):
    """Pick (b_pad, tb): biggest lane-dense batch tile whose two pipeline
    buffers of the (cp, tb) logits block fit the VMEM budget."""
    per_col = 2 * cp * itemsize
    tb_cap = (_LOGITS_VMEM_BUDGET // max(per_col, 1)) // _LANE * _LANE
    tb_cap = max(_LANE, min(tb_cap, 8192))
    b_pad_min = _round_up(max(batch, _LANE), _LANE)
    if b_pad_min <= tb_cap:
        # whole (padded) batch in one tile -> batch grid axis collapses to 1 step
        return b_pad_min, b_pad_min
    b_pad = _round_up(batch, tb_cap)
    return b_pad, tb_cap


def _fused_masked_ce_kernel(logits_ref, targets_ref, tids_ref, out_ref,
                            acc_ce, acc_cnt):
    """Grid step = (task slot t, batch tile b).

    logits_ref:  (1, cp, tb)  native dtype, class on sublane, batch on lane
    targets_ref: (1, b_pad) i32, resident across the whole grid
    tids_ref:    (1, b_pad) i32, per-sample task SLOT index (-1 = padding)
    out_ref:     (1, 8, 128) f32, written only on the last batch tile:
                 [0,0,0] = sum of masked CE, [0,0,1] = count
    acc_ce/acc_cnt: (1, tb) f32 lane-wise partial accumulators (VMEM scratch)
    """
    t = pl.program_id(0)
    b = pl.program_id(1)
    nb = pl.num_programs(1)
    tb = acc_ce.shape[1]

    @pl.when(b == 0)
    def _():
        acc_ce[...] = jnp.zeros_like(acc_ce)
        acc_cnt[...] = jnp.zeros_like(acc_cnt)

    logits = logits_ref[0].astype(jnp.float32)                     # (cp, tb)
    cp = logits.shape[0]
    off = pl.multiple_of(b * tb, _LANE)
    tgt = targets_ref[:, pl.ds(off, tb)]                           # (1, tb)
    tid = tids_ref[:, pl.ds(off, tb)]                              # (1, tb)

    # numerically stable log-sum-exp over the class (sublane) axis, reusing
    # `shifted` for both the exp and the target-logit gather
    col_max = jnp.max(logits, axis=0, keepdims=True)               # (1, tb)
    shifted = logits - col_max                                     # (cp, tb)
    sum_exp = jnp.sum(jnp.exp(shifted), axis=0, keepdims=True)     # (1, tb)
    cls = jax.lax.broadcasted_iota(jnp.int32, (cp, tb), 0)
    tgt_shifted = jnp.sum(jnp.where(cls == tgt, shifted, 0.0),
                          axis=0, keepdims=True)                   # (1, tb)
    per_sample_ce = jnp.log(sum_exp) - tgt_shifted                 # (1, tb)

    # mask BEFORE accumulation (other-task samples can carry ~1e30 values)
    mask = tid == t
    acc_ce[...] += jnp.where(mask, per_sample_ce, 0.0)
    acc_cnt[...] += jnp.where(mask, 1.0, 0.0)

    @pl.when(b == nb - 1)
    def _():
        s = jnp.sum(acc_ce[...])
        c = jnp.sum(acc_cnt[...])
        row = jax.lax.broadcasted_iota(jnp.int32, (1, 8, _LANE), 1)
        lane = jax.lax.broadcasted_iota(jnp.int32, (1, 8, _LANE), 2)
        out_ref[...] = jnp.where((row == 0) & (lane == 0), s,
                                 jnp.where((row == 0) & (lane == 1), c, 0.0))


def _per_task_masked_ce(logits_dict, targets, task_type_id, task_name2int):
    """Mean cross-entropy per task over samples with task_type_id == task id.

    Returns {task_name: scalar}; NaN for a task with zero samples, matching
    F.cross_entropy(mean) on an empty batch in the reference module.
    """
    task_names = list(logits_dict.keys())
    num_tasks = len(task_names)
    batch = int(targets.shape[0])

    dt = jnp.result_type(*[l.dtype for l in logits_dict.values()])
    itemsize = jnp.dtype(dt).itemsize
    # dtype-dependent sublane multiple: 8 (f32) / 16 (bf16) / 32 (int8/fp8)
    sub = {4: 8, 2: 16, 1: 32}.get(itemsize, 8)
    c_max = max(int(l.shape[1]) for l in logits_dict.values())
    cp = _round_up(max(c_max, sub), sub)

    b_pad, tb = _choose_batch_tiling(batch, cp, itemsize)
    nb = b_pad // tb

    # TODO(synk): for very large / heterogeneous class counts, tile the class
    # axis (online LSE driven by per-task class counts) or bucket tasks instead
    # of padding every task to the global cp.
    # TODO(synk): the stacked slab below is materialized in HBM; for very large
    # C on v5e consider per-task ANY-space DMA or allow_input_fusion instead.
    stacked = []
    for name in task_names:
        lt = logits_dict[name].astype(dt).T                        # (C, B)
        stacked.append(jnp.pad(lt, ((0, cp - lt.shape[0]), (0, b_pad - batch)),
                               constant_values=_NEG))
    logits_stacked = jnp.stack(stacked, axis=0)                    # (T, cp, b_pad)

    targets_p = jnp.pad(targets.astype(jnp.int32),
                        (0, b_pad - batch)).reshape(1, b_pad)
    # Remap per-sample task ids to stack-slot indices so the kernel compares
    # against pl.program_id(0) directly (no scalar-prefetch table needed).
    slot_ids = jnp.full((batch,), -1, jnp.int32)
    tids32 = task_type_id.astype(jnp.int32)
    for slot, name in enumerate(task_names):
        slot_ids = jnp.where(tids32 == task_name2int[name], slot, slot_ids)
    slots_p = jnp.pad(slot_ids, (0, b_pad - batch),
                      constant_values=-1).reshape(1, b_pad)

    vmem_limit = (2 * cp * tb * itemsize        # double-buffered logits blocks
                  + 2 * 2 * b_pad * 4           # resident targets / slot ids
                  + 2 * tb * 4                  # lane-wise accumulators
                  + 2 * 8 * _LANE * 4           # output block
                  + (2 << 20))                  # headroom
    vmem_limit = int(min(max(vmem_limit, 8 << 20), 40 << 20))

    # TODO(synk): on v7x with a single task, split the batch into a leading
    # 2-way "parallel" axis so both TensorCores are used.
    out = pl.pallas_call(
        _fused_masked_ce_kernel,
        out_shape=jax.ShapeDtypeStruct((num_tasks, 8, _LANE), jnp.float32),
        grid_spec=pltpu.PrefetchScalarGridSpec(
            num_scalar_prefetch=0,
            grid=(num_tasks, nb),
            in_specs=[
                pl.BlockSpec((1, cp, tb), lambda t, b: (t, 0, b)),
                pl.BlockSpec((1, b_pad), lambda t, b: (0, 0)),
                pl.BlockSpec((1, b_pad), lambda t, b: (0, 0)),
            ],
            out_specs=pl.BlockSpec((1, 8, _LANE), lambda t, b: (t, 0, 0)),
            scratch_shapes=[pltpu.VMEM((1, tb), jnp.float32),
                            pltpu.VMEM((1, tb), jnp.float32)],
        ),
        compiler_params=pltpu.CompilerParams(
            dimension_semantics=("parallel", "arbitrary"),
            vmem_limit_bytes=vmem_limit),
    )(logits_stacked, targets_p, slots_p)

    sums = out[:, 0, 0]
    cnts = out[:, 0, 1]
    per_task = sums / cnts          # 0/0 -> NaN for empty tasks (matches reference)
    return {name: per_task[i] for i, name in enumerate(task_names)}


def weighted_multi_task_loss(logits_dict, targets, task_type_id,
                             task_name2int, task_weights, return_dict=False):
    """Forward pass of WeightedMultiTaskLoss (CE sample loss)."""
    per_task = _per_task_masked_ce(logits_dict, targets, task_type_id, task_name2int)
    losses = {"loss_" + name: loss for name, loss in per_task.items()}

    # NaN / non-positive task losses are skipped, then normalize by kept weights.
    weighted_sum = jnp.float32(0.0)
    weights = jnp.float32(0.0)
    for name, loss in per_task.items():
        w = jnp.float32(task_weights[name])
        valid = jnp.logical_and(jnp.logical_not(jnp.isnan(loss)), loss > 0)
        weighted_sum = weighted_sum + jnp.where(valid, loss * w, 0.0)
        weights = weights + jnp.where(valid, w, 0.0)
    normed_sum = weighted_sum / weights

    if return_dict:
        losses["val_loss"] = normed_sum
        return losses
    return normed_sum


def nlpc_loss(logits_dict, targets, task_type_id, task_name2int,
              task_weights=None, split="train"):
    """NLPCLoss default path: CE sample loss + (uniform/dict) task weights."""
    # TODO(synk): focal / soft-F1 sample losses and DTP / uncertainty weighting
    # variants of NLPCLoss are not implemented here (only the default CE path).
    if task_weights is None:
        task_weights = {name: 1.0 for name in task_name2int}
    return weighted_multi_task_loss(logits_dict, targets, task_type_id,
                                    task_name2int, task_weights,
                                    return_dict=(split != "train"))


if __name__ == "__main__":
    key = jax.random.PRNGKey(0)
    k1, k2, k3, k4 = jax.random.split(key, 4)

    batch = 8
    task_name2int = {"sentiment": 0, "topic": 1}
    task_weights = {"sentiment": 1.0, "topic": 2.0}
    num_classes = {"sentiment": 5, "topic": 7}

    # Per-sample task assignment and (task-valid) targets.
    task_type_id = jax.random.randint(k1, (batch,), 0, 2, dtype=jnp.int32)
    tgt_sent = jax.random.randint(k2, (batch,), 0, num_classes["sentiment"],
                                  dtype=jnp.int32)
    tgt_topic = jax.random.randint(k3, (batch,), 0, num_classes["topic"],
                                   dtype=jnp.int32)
    targets = jnp.where(task_type_id == 0, tgt_sent, tgt_topic)

    # Model logits for every task (full batch; masking happens in the loss).
    ka, kb = jax.random.split(k4)
    logits = {
        "sentiment": jax.random.normal(
            ka, (batch, num_classes["sentiment"]), dtype=jnp.float32),
        "topic": jax.random.normal(
            kb, (batch, num_classes["topic"]), dtype=jnp.float32),
    }

    out = weighted_multi_task_loss(
        logits, targets, task_type_id, task_name2int, task_weights,
        return_dict=True)
    out = jax.block_until_ready(out)
    val = out["val_loss"]

    # Pure-JAX reference check (same semantics as the PyTorch module).
    def _reference():
        ws = jnp.float32(0.0)
        w = jnp.float32(0.0)
        for name, logit in logits.items():
            mask = task_type_id == task_name2int[name]
            logp = jax.nn.log_softmax(logit.astype(jnp.float32), axis=-1)
            per = -jnp.take_along_axis(logp, targets[:, None], axis=1)[:, 0]
            cnt = jnp.sum(mask.astype(jnp.float32))
            loss = jnp.sum(jnp.where(mask, per, 0.0)) / cnt
            tw = jnp.float32(task_weights[name])
            valid = jnp.logical_and(jnp.logical_not(jnp.isnan(loss)), loss > 0)
            ws = ws + jnp.where(valid, loss * tw, 0.0)
            w = w + jnp.where(valid, tw, 0.0)
        return ws / w

    expected = _reference()
    assert jnp.isfinite(val), "expected a finite weighted loss"
    assert bool(jnp.allclose(val, expected, rtol=1e-5, atol=1e-5)), (val, expected)
    print("KERNEL_OK")
</pallas_src>

<mosaic_0001>
module attributes {stable_mosaic.version = 11 : i64} {
  func.func @_fused_masked_ce_kernel(%arg0: i32, %arg1: i32, %arg2: memref<1x8x128xf32, #tpu.memory_space<vmem>>, %arg3: memref<1x128xi32, #tpu.memory_space<vmem>>, %arg4: memref<1x128xi32, #tpu.memory_space<vmem>>, %arg5: memref<1x8x128xf32, #tpu.memory_space<vmem>>, %arg6: memref<1x128xf32, #tpu.memory_space<vmem>>, %arg7: memref<1x128xf32, #tpu.memory_space<vmem>>) attributes {dimension_semantics = [#tpu.dimension_semantics<parallel>, #tpu.dimension_semantics<arbitrary>], iteration_bounds = array<i64: 2, 1>, scalar_prefetch = 0 : i64, scratch_operands = 2 : i64, tpu.core_type = #tpu.core_type<tc>, window_params = [{transform_indices = @transform_0, window_bounds = array<i64: 1, 8, 128>}, {pipeline_mode = #tpu.pipeline_mode<synchronous>, transform_indices = @transform_1, window_bounds = array<i64: 1, 128>}, {pipeline_mode = #tpu.pipeline_mode<synchronous>, transform_indices = @transform_2, window_bounds = array<i64: 1, 128>}, {transform_indices = @transform_3, window_bounds = array<i64: 1, 8, 128>}]} {
    %c0_i32 = arith.constant 0 : i32
    %0 = arith.cmpi eq, %arg1, %c0_i32 : i32
    %1 = arith.extui %0 : i1 to i32
    %c0_i32_0 = arith.constant 0 : i32
    %2 = arith.cmpi ne, %1, %c0_i32_0 : i32
    scf.if %2 {
      %cst_21 = arith.constant 0.000000e+00 : f32
      %43 = vector.broadcast %cst_21 : f32 to vector<1x128xf32>
      %c0_22 = arith.constant 0 : index
      %c0_23 = arith.constant 0 : index
      %44 = vector.load %arg6[%c0_22, %c0_23] : memref<1x128xf32, #tpu.memory_space<vmem>>, vector<1x128xf32>
      tpu.vector_store %arg6[%c0_22, %c0_23], %43 {strides = array<i32>} : memref<1x128xf32, #tpu.memory_space<vmem>>, vector<1x128xf32>,
      %cst_24 = arith.constant 0.000000e+00 : f32
      %45 = vector.broadcast %cst_24 : f32 to vector<1x128xf32>
      %c0_25 = arith.constant 0 : index
      %c0_26 = arith.constant 0 : index
      %46 = vector.load %arg7[%c0_25, %c0_26] : memref<1x128xf32, #tpu.memory_space<vmem>>, vector<1x128xf32>
      tpu.vector_store %arg7[%c0_25, %c0_26], %45 {strides = array<i32>} : memref<1x128xf32, #tpu.memory_space<vmem>>, vector<1x128xf32>,
    } else {
    }
    %c0 = arith.constant 0 : index
    %c0_1 = arith.constant 0 : index
    %c0_2 = arith.constant 0 : index
    %3 = vector.load %arg2[%c0, %c0_1, %c0_2] : memref<1x8x128xf32, #tpu.memory_space<vmem>>, vector<1x8x128xf32>
    %4 = vector.shape_cast %3 : vector<1x8x128xf32> to vector<8x128xf32>
    %c128_i32 = arith.constant 128 : i32
    %5 = arith.muli %arg1, %c128_i32 : i32
    %6 = tpu.assume_multiple %5, 128 : i32
    %c0_3 = arith.constant 0 : index
    %7 = arith.index_cast %6 : i32 to index
    %8 = vector.load %arg3[%c0_3, %7] : memref<1x128xi32, #tpu.memory_space<vmem>>, vector<1x128xi32>
    %c0_4 = arith.constant 0 : index
    %9 = arith.index_cast %6 : i32 to index
    %10 = vector.load %arg4[%c0_4, %9] : memref<1x128xi32, #tpu.memory_space<vmem>>, vector<1x128xi32>
    %cst = arith.constant dense<0xFF800000> : vector<128xf32>
    %11 = vector.multi_reduction <maximumf>, %4, %cst [0] : vector<8x128xf32> to vector<128xf32>
    %12 = vector.shape_cast %11 : vector<128xf32> to vector<1x128xf32>
    %13 = vector.broadcast %12 : vector<1x128xf32> to vector<8x128xf32>
    %14 = arith.subf %4, %13 : vector<8x128xf32>
    %15 = math.exp %14 : vector<8x128xf32>
    %cst_5 = arith.constant dense<0.000000e+00> : vector<128xf32>
    %16 = vector.multi_reduction <add>, %15, %cst_5 [0] : vector<8x128xf32> to vector<128xf32>
    %17 = vector.shape_cast %16 : vector<128xf32> to vector<1x128xf32>
    %18 = tpu.iota {dimensions = array<i32: 0>} : vector<8x128xi32>
    %19 = vector.broadcast %8 : vector<1x128xi32> to vector<8x128xi32>
    %20 = arith.cmpi eq, %18, %19 : vector<8x128xi32>
    %cst_6 = arith.constant 0.000000e+00 : f32
    %21 = vector.broadcast %cst_6 : f32 to vector<8x128xf32>
    %22 = arith.select %20, %14, %21 : vector<8x128xi1>, vector<8x128xf32>
    %cst_7 = arith.constant dense<0.000000e+00> : vector<128xf32>
    %23 = vector.multi_reduction <add>, %22, %cst_7 [0] : vector<8x128xf32> to vector<128xf32>
    %24 = vector.shape_cast %23 : vector<128xf32> to vector<1x128xf32>
    %25 = math.log %17 : vector<1x128xf32>
    %26 = arith.subf %25, %24 : vector<1x128xf32>
    %27 = vector.broadcast %arg0 : i32 to vector<1x128xi32>
    %28 = arith.cmpi eq, %10, %27 : vector<1x128xi32>
    %c0_8 = arith.constant 0 : index
    %c0_9 = arith.constant 0 : index
    %29 = vector.load %arg6[%c0_8, %c0_9] : memref<1x128xf32, #tpu.memory_space<vmem>>, vector<1x128xf32>
    %cst_10 = arith.constant 0.000000e+00 : f32
    %30 = vector.broadcast %cst_10 : f32 to vector<1x128xf32>
    %31 = arith.select %28, %26, %30 : vector<1x128xi1>, vector<1x128xf32>
    %32 = arith.addf %29, %31 : vector<1x128xf32>
    %c0_11 = arith.constant 0 : index
    %c0_12 = arith.constant 0 : index
    %33 = vector.load %arg6[%c0_11, %c0_12] : memref<1x128xf32, #tpu.memory_space<vmem>>, vector<1x128xf32>
    tpu.vector_store %arg6[%c0_11, %c0_12], %32 {strides = array<i32>} : memref<1x128xf32, #tpu.memory_space<vmem>>, vector<1x128xf32>,
    %c0_13 = arith.constant 0 : index
    %c0_14 = arith.constant 0 : index
    %34 = vector.load %arg7[%c0_13, %c0_14] : memref<1x128xf32, #tpu.memory_space<vmem>>, vector<1x128xf32>
    %cst_15 = arith.constant 1.000000e+00 : f32
    %cst_16 = arith.constant 0.000000e+00 : f32
    %35 = vector.broadcast %cst_15 : f32 to vector<1x128xf32>
    %36 = vector.broadcast %cst_16 : f32 to vector<1x128xf32>
    %37 = arith.select %28, %35, %36 : vector<1x128xi1>, vector<1x128xf32>
    %38 = arith.addf %34, %37 : vector<1x128xf32>
    %c0_17 = arith.constant 0 : index
    %c0_18 = arith.constant 0 : index
    %39 = vector.load %arg7[%c0_17, %c0_18] : memref<1x128xf32, #tpu.memory_space<vmem>>, vector<1x128xf32>
    tpu.vector_store %arg7[%c0_17, %c0_18], %38 {strides = array<i32>} : memref<1x128xf32, #tpu.memory_space<vmem>>, vector<1x128xf32>,
    %c0_i32_19 = arith.constant 0 : i32
    %40 = arith.cmpi eq, %arg1, %c0_i32_19 : i32
    %41 = arith.extui %40 : i1 to i32
    %c0_i32_20 = arith.constant 0 : i32
    %42 = arith.cmpi ne, %41, %c0_i32_20 : i32
    scf.if %42 {
      %c0_21 = arith.constant 0 : index
      %c0_22 = arith.constant 0 : index
      %43 = vector.load %arg6[%c0_21, %c0_22] : memref<1x128xf32, #tpu.memory_space<vmem>>, vector<1x128xf32>
      %44 = vector.shape_cast %43 : vector<1x128xf32> to vector<1x1x128xf32>
      %cst_23 = arith.constant dense<0.000000e+00> : vector<1xf32>
      %45 = vector.multi_reduction <add>, %44, %cst_23 [1, 2] : vector<1x1x128xf32> to vector<1xf32>
      %46 = vector.shape_cast %45 : vector<1xf32> to vector<1x1x1xf32>
      %47 = vector.extract %46[0, 0, 0] : f32 from vector<1x1x1xf32>
      %c0_24 = arith.constant 0 : index
      %c0_25 = arith.constant 0 : index
      %48 = vector.load %arg7[%c0_24, %c0_25] : memref<1x128xf32, #tpu.memory_space<vmem>>, vector<1x128xf32>
      %49 = vector.shape_cast %48 : vector<1x128xf32> to vector<1x1x128xf32>
      %cst_26 = arith.constant dense<0.000000e+00> : vector<1xf32>
      %50 = vector.multi_reduction <add>, %49, %cst_26 [1, 2] : vector<1x1x128xf32> to vector<1xf32>
      %51 = vector.shape_cast %50 : vector<1xf32> to vector<1x1x1xf32>
      %52 = vector.extract %51[0, 0, 0] : f32 from vector<1x1x1xf32>
      %53 = tpu.iota {dimensions = array<i32: 1>} : vector<1x8x128xi32>
      %54 = tpu.iota {dimensions = array<i32: 2>} : vector<1x8x128xi32>
      %c0_i32_27 = arith.constant 0 : i32
      %55 = vector.broadcast %c0_i32_27 : i32 to vector<1x8x128xi32>
      %56 = arith.cmpi eq, %53, %55 : vector<1x8x128xi32>
      %c0_i32_28 = arith.constant 0 : i32
      %57 = vector.broadcast %c0_i32_28 : i32 to vector<1x8x128xi32>
      %58 = arith.cmpi eq, %54, %57 : vector<1x8x128xi32>
      %59 = arith.andi %56, %58 : vector<1x8x128xi1>
      %c0_i32_29 = arith.constant 0 : i32
      %60 = vector.broadcast %c0_i32_29 : i32 to vector<1x8x128xi32>
      %61 = arith.cmpi eq, %53, %60 : vector<1x8x128xi32>
      %c1_i32 = arith.constant 1 : i32
      %62 = vector.broadcast %c1_i32 : i32 to vector<1x8x128xi32>
      %63 = arith.cmpi eq, %54, %62 : vector<1x8x128xi32>
      %64 = arith.andi %61, %63 : vector<1x8x128xi1>
      %cst_30 = arith.constant 0.000000e+00 : f32
      %65 = vector.broadcast %52 : f32 to vector<1x8x128xf32>
      %66 = vector.broadcast %cst_30 : f32 to vector<1x8x128xf32>
      %67 = arith.select %64, %65, %66 : vector<1x8x128xi1>, vector<1x8x128xf32>
      %68 = vector.broadcast %47 : f32 to vector<1x8x128xf32>
      %69 = arith.select %59, %68, %67 : vector<1x8x128xi1>, vector<1x8x128xf32>
      %c0_31 = arith.constant 0 : index
      %c0_32 = arith.constant 0 : index
      %c0_33 = arith.constant 0 : index
      %70 = vector.load %arg5[%c0_31, %c0_32, %c0_33] : memref<1x8x128xf32, #tpu.memory_space<vmem>>, vector<1x8x128xf32>
      tpu.vector_store %arg5[%c0_31, %c0_32, %c0_33], %69 {strides = array<i32>} : memref<1x8x128xf32, #tpu.memory_space<vmem>>, vector<1x8x128xf32>,
    } else {
    }
    return
  }
  func.func @transform_0(%arg0: i32, %arg1: i32) -> (i32, i32, i32) {
    %c0_i32 = arith.constant 0 : i32
    %c0_i32_0 = arith.constant 0 : i32
    return %arg0, %c0_i32, %arg1 : i32, i32, i32
  }
  func.func @transform_1(%arg0: i32, %arg1: i32) -> (i32, i32) {
    %c0_i32 = arith.constant 0 : i32
    %c0_i32_0 = arith.constant 0 : i32
    %c0_i32_1 = arith.constant 0 : i32
    return %c0_i32, %c0_i32_0 : i32, i32
  }
  func.func @transform_2(%arg0: i32, %arg1: i32) -> (i32, i32) {
    %c0_i32 = arith.constant 0 : i32
    %c0_i32_0 = arith.constant 0 : i32
    %c0_i32_1 = arith.constant 0 : i32
    return %c0_i32, %c0_i32_0 : i32, i32
  }
  func.func @transform_3(%arg0: i32, %arg1: i32) -> (i32, i32, i32) {
    %c0_i32 = arith.constant 0 : i32
    %c0_i32_0 = arith.constant 0 : i32
    %c0_i32_1 = arith.constant 0 : i32
    return %arg0, %c0_i32, %c0_i32_0 : i32, i32, i32
  }
}

</mosaic_0001>

<llo_original>
// kernel: tpu_custom_call.1
$region0: #{tpu_custom_call.1}
  #allocation0 [shape = 'u32[]', space=smem, size = 0x4, offset = 0x4, fixed_abs, tag = 'smem constant byte address 0x4 - core index']
  #allocation1 [shape = 'u32[144,128]{1,0:T(1,128)}', space=vmem, size = 0x12000, scoped, tag = 'internal scratch']
  #allocation2 [shape = 'f32[1,128]{1,0:T(1,128)}', space=vmem, size = 0x200, scoped, tag = 'scratch operand']
  #allocation3 [shape = 'f32[1,128]{1,0:T(1,128)}', space=vmem, size = 0x200, scoped, tag = 'scratch operand']
  %s0 = inlined_call_operand.hbm [shape: f32[2,8,128], index: 0, kind: input, shape index: {}]
  %s1 = inlined_call_operand.vmem [shape: s32[1,128], index: 1, kind: input, shape index: {}]
  %s2 = inlined_call_operand.vmem [shape: s32[1,128], index: 2, kind: input, shape index: {}]
  %s3 = inlined_call_operand.hbm [shape: f32[2,8,128], index: 3, kind: output, shape index: {}]
  %s4 = sld [smem:[#allocation0]]
  $region57: #{tpu_custom_call.1} parent=0
    _
  %s6 = ssub.s32 1, %s4
  %s7 = scalar_select 0, %s6, %s4
  $region1: #{tpu_custom_call.1} parent=0
    #allocation4 [shape = 'u8[8192]{0}', space=vmem, size = 0x2000, scoped, tag = 'input window, operand 0']
    #allocation5 [shape = 's32[2]{0}', space=sflag, size = 0x8, scoped, tag = 'scoped memory for tpu_custom_call.1']
    #allocation6 [shape = 's32[2]{0}', space=sflag, size = 0x8, scoped, tag = 'scoped memory for tpu_custom_call.1']
    #allocation7 [shape = 'u8[8192]{0}', space=vmem, size = 0x2000, scoped, tag = 'output window, operand 0']
    %8 = vsyncpa [#allocation5], 0
    %s9 = scalar_lea.sflag [#allocation5], 1
    %10 = vsyncpa %s9, 0
    %11 = vsyncpa [#allocation6], 0
    %s12 = scalar_lea.sflag [#allocation6], 1
    %13 = vsyncpa %s12, 0
    loop: start=0, step=1, limit=4
    $region2: #{tpu_custom_call.1} parent=1 // loop_pre_header
      _
    $region3: #{tpu_custom_call.1} parent=1 // loop_header
      %s15 = sphi 0, %s19
      %p16 = scmp.ge.s32.totalorder %s15, 4
      %s22 = sphi 0, %s34
      %s23 = sphi 0, %s30
      %s24 = sphi 0, %s22
      %s25 = sphi 0, %s23
      %s26 = sphi 0, %s24
      %s27 = sphi 0, %s25
      %s39 = sphi 0, %s41
      %s42 = sphi 0, %s39
      %s43 = sphi 0, %s42
      %s59 = sphi 0, %s43
      %s63 = sphi 0, %s63
      %s65 = sphi 0, %s63
      %s66 = sphi 0, %s65
      %s80 = sphi 0, %s66
      %s84 = sphi 0, %s84
      %s86 = sphi 0, %s84
      %s87 = sphi 0, %s86
      %s101 = sphi 0, %s87
      %s107 = sphi 0, %s109
      %s110 = sphi 0, %s107
      %s111 = sphi 0, %s110
      %s127 = sphi 0, %s111
    $region4: #{tpu_custom_call.1} parent=1 // loop_header_branch
      %18 = sbr.rel (%p16) target = $region8
    $region5: #{tpu_custom_call.1} parent=1 // loop_body
      %s20 = ssub.s32 %s15, 1
      %s21 = ssub.s32 %s15, 2
      %s28 = sadd.s32 1, %s23
      %p29 = scmp.ge.s32.totalorder %s28, 1
      %s30 = scalar_select %p29, 0, %s28
      %s31 = sadd.s32 1, %s22
      %s32 = scalar_select %p29, %s31, %s22
      %p33 = scmp.ge.s32.totalorder %s32, 2
      %s34 = scalar_select %p33, 0, %s32
      %s35 = ssub.s32 %s22, %s34
      %s36 = ssub.s32 %s23, %s30
      %s37 = sor.u32 %s35, %s36
      %p38 = scmp.eq.s32.totalorder %s37, 0
      %s40 = sadd.s32 %s39, 1
      %s41 = scalar_select %p38, %s39, %s40
      %p44 = pneg %p38
      %p45 = scmp.eq.s32.totalorder %s15, 1
      %p46 = por %p44, %p45
      %p47 = scmp.ne.s32.totalorder %s39, %s42
      %p48 = scmp.eq.s32.totalorder %s15, 0
      %p49 = por %p47, %p48
      %p50 = scmp.ne.s32.totalorder %s39, %s42
      %p51 = scmp.eq.s32.totalorder %s20, 1
      %p52 = por %p50, %p51
      %p53 = scmp.ne.s32.totalorder %s42, %s43
      %p54 = scmp.eq.s32.totalorder %s20, 0
      %p55 = por %p53, %p54
      %p56 = scmp.ne.s32.totalorder %s42, %s43
      %p57 = scmp.eq.s32.totalorder %s21, 1
      %p58 = por %p56, %p57
      %p60 = scmp.ne.s32.totalorder %s43, %s59
      %p61 = scmp.eq.s32.totalorder %s21, 0
      %p62 = por %p60, %p61
      %s64 = sadd.s32 %s63, 1
      %p67 = scmp.eq.s32.totalorder %s15, 1
      %p68 = scmp.ne.s32.totalorder %s63, %s65
      %p69 = scmp.eq.s32.totalorder %s15, 0
      %p70 = por %p68, %p69
      %p71 = scmp.ne.s32.totalorder %s63, %s65
      %p72 = scmp.eq.s32.totalorder %s20, 1
      %p73 = por %p71, %p72
      %p74 = scmp.ne.s32.totalorder %s65, %s66
      %p75 = scmp.eq.s32.totalorder %s20, 0
      %p76 = por %p74, %p75
      %p77 = scmp.ne.s32.totalorder %s65, %s66
      %p78 = scmp.eq.s32.totalorder %s21, 1
      %p79 = por %p77, %p78
      %p81 = scmp.ne.s32.totalorder %s66, %s80
      %p82 = scmp.eq.s32.totalorder %s21, 0
      %p83 = por %p81, %p82
      %s85 = sadd.s32 %s84, 1
      %p88 = scmp.eq.s32.totalorder %s15, 1
      %p89 = scmp.ne.s32.totalorder %s84, %s86
      %p90 = scmp.eq.s32.totalorder %s15, 0
      %p91 = por %p89, %p90
      %p92 = scmp.ne.s32.totalorder %s84, %s86
      %p93 = scmp.eq.s32.totalorder %s20, 1
      %p94 = por %p92, %p93
      %p95 = scmp.ne.s32.totalorder %s86, %s87
      %p96 = scmp.eq.s32.totalorder %s20, 0
      %p97 = por %p95, %p96
      %p98 = scmp.ne.s32.totalorder %s86, %s87
      %p99 = scmp.eq.s32.totalorder %s21, 1
      %p100 = por %p98, %p99
      %p102 = scmp.ne.s32.totalorder %s87, %s101
      %p103 = scmp.eq.s32.totalorder %s21, 0
      %p104 = por %p102, %p103
      %s105 = ssub.s32 %s22, %s34
      %p106 = scmp.eq.s32.totalorder %s105, 0
      %s108 = sadd.s32 %s107, 1
      %s109 = scalar_select %p106, %s107, %s108
      %p112 = pneg %p106
      %p113 = scmp.eq.s32.totalorder %s15, 1
      %p114 = por %p112, %p113
      %p115 = scmp.ne.s32.totalorder %s107, %s110
      %p116 = scmp.eq.s32.totalorder %s15, 0
      %p117 = por %p115, %p116
      %p118 = scmp.ne.s32.totalorder %s107, %s110
      %p119 = scmp.eq.s32.totalorder %s20, 1
      %p120 = por %p118, %p119
      %p121 = scmp.ne.s32.totalorder %s110, %s111
      %p122 = scmp.eq.s32.totalorder %s20, 0
      %p123 = por %p121, %p122
      %p124 = scmp.ne.s32.totalorder %s110, %s111
      %p125 = scmp.eq.s32.totalorder %s21, 1
      %p126 = por %p124, %p125
      %p128 = scmp.ne.s32.totalorder %s111, %s127
      %p129 = scmp.eq.s32.totalorder %s21, 0
      %p130 = por %p128, %p129
      %p131 = scmp.le.s32.totalorder 1, %s15
      %p132 = scmp.lt.s32.totalorder %s15, 3
      %p133 = pnand %p131, %p132
      %p134 = pneg %p133
      // Predicated region
      $region9: #{tpu_custom_call.1} parent=5 // pred_check
        _
      $region10: #{tpu_custom_call.1} parent=5 // pred_check_branch
        %136 = sbr.rel (%p133) target = $region12
      $region11: #{tpu_custom_call.1} parent=5 // pred_region
        %s137 = ssub.s32 %s15, 1
        // Predicated region
        $region13: #{tpu_custom_call.1} parent=11 // pred_check
          %p138 = pneg %p76
        $region14: #{tpu_custom_call.1} parent=11 // pred_check_branch
          %140 = sbr.rel (%p138) target = $region16
        $region15: #{tpu_custom_call.1} parent=11 // pred_region
          _
        $region16: #{tpu_custom_call.1} parent=11 // pred_fallthru
          _
        // Predicated region
        $region17: #{tpu_custom_call.1} parent=11 // pred_check
          %p141 = pneg %p97
        $region18: #{tpu_custom_call.1} parent=11 // pred_check_branch
          %143 = sbr.rel (%p141) target = $region20
        $region19: #{tpu_custom_call.1} parent=11 // pred_region
          _
        $region20: #{tpu_custom_call.1} parent=11 // pred_fallthru
          _
      $region12: #{tpu_custom_call.1} parent=5 // pred_fallthru
        _
      %p144 = scmp.lt.s32.totalorder %s15, 2
      // Predicated region
      $region21: #{tpu_custom_call.1} parent=5 // pred_check
        %p145 = pneg %p144
      $region22: #{tpu_custom_call.1} parent=5 // pred_check_branch
        %147 = sbr.rel (%p145) target = $region24
      $region23: #{tpu_custom_call.1} parent=5 // pred_region
        // Predicated region
        $region25: #{tpu_custom_call.1} parent=23 // pred_check
          %p148 = pneg %p49
        $region26: #{tpu_custom_call.1} parent=23 // pred_check_branch
          %150 = sbr.rel (%p148) target = $region28
        $region27: #{tpu_custom_call.1} parent=23 // pred_region
          %s151 = sand.u32 %s39, 1
          %s152 = scalar_lea.sflag [#allocation5], %s151
          %s153 = sand.u32 %s39, 1
          %s154 = smul.addr %s153, 8
          %s155 = scalar_lea.vmem [#allocation4], %s154
          %s157 = ssub.s32 128, 128
          %158 = vsyncadd %s152, %s157
          %s159 = sadd.s32 %s23, %s22
          %s160 = smul.addr %s159, 128
          %s161 = scalar_lea.hbm %s0, %s160
          %s163 = sshll.u32 %s155, 4
          %s164 = int_to_ptr.vmem [resolvable:$true] %s163
          %166 = dma.hbm_to_vmem [thread:$0]  %s161, 128, %s164, %s152
        $region28: #{tpu_custom_call.1} parent=23 // pred_fallthru
          _
      $region24: #{tpu_custom_call.1} parent=5 // pred_fallthru
        _
      %p167 = scmp.le.s32.totalorder 1, %s15
      %p168 = scmp.lt.s32.totalorder %s15, 3
      %p169 = pnand %p167, %p168
      %p170 = pneg %p169
      // Predicated region
      $region29: #{tpu_custom_call.1} parent=5 // pred_check
        _
      $region30: #{tpu_custom_call.1} parent=5 // pred_check_branch
        %172 = sbr.rel (%p169) target = $region32
      $region31: #{tpu_custom_call.1} parent=5 // pred_region
        %s173 = ssub.s32 %s15, 1
        %s174 = sand.u32 %s42, 1
        %s175 = scalar_lea.sflag [#allocation5], %s174
        %s176 = sand.u32 %s42, 1
        %s177 = smul.addr %s176, 8
        %s178 = scalar_lea.vmem [#allocation4], %s177
        // Predicated region
        $region33: #{tpu_custom_call.1} parent=31 // pred_check
          %p179 = pneg %p55
        $region34: #{tpu_custom_call.1} parent=31 // pred_check_branch
          %181 = sbr.rel (%p179) target = $region36
        $region35: #{tpu_custom_call.1} parent=31 // pred_region
          %182 = dma.done %s175, 128
        $region36: #{tpu_custom_call.1} parent=31 // pred_fallthru
          _
        %s183 = sand.u32 %s42, 1
        %s184 = scalar_lea.sflag [#allocation5], %s183
        %s185 = sand.u32 %s42, 1
        %s186 = smul.addr %s185, 8
        %s187 = scalar_lea.vmem [#allocation4], %s186
        %p188 = pneg %p55
        %p189 = pneg %p52
        %p190 = pneg %p76
        %p191 = pneg %p73
        %p192 = pneg %p97
        %p193 = pneg %p94
        %p194 = pneg %p123
        %p195 = pneg %p120
        %s196 = sand.u32 %s110, 1
        %s197 = scalar_lea.sflag [#allocation6], %s196
        %s198 = sand.u32 %s110, 1
        %s199 = smul.addr %s198, 8
        %s200 = scalar_lea.vmem [#allocation7], %s199
        %p201 = scmp.eq.s32.totalorder %s25, 0
        // Predicated region
        $region37: #{tpu_custom_call.1} parent=31 // pred_check
          %p202 = pneg %p201
        $region38: #{tpu_custom_call.1} parent=31 // pred_check_branch
          %204 = sbr.rel (%p202) target = $region40
        $region39: #{tpu_custom_call.1} parent=31 // pred_region
          %205 = vst [vmem:[#allocation2] sm:$0x1] 0.0
          %206 = vst [vmem:[#allocation3] sm:$0x1] 0.0
        $region40: #{tpu_custom_call.1} parent=31 // pred_fallthru
          _
        %v207 = vld [vmem:[%s178] sm:$0xff]
        %s208 = smul.u32 %s25, 128
        %s209 = sshra.s32 %s208, 7
        %s210 = sand.u32 %s208, 127
        %s211 = scalar_lea.vmem %s1, %s209
        %v212 = vld [vmem:[%s211] sm:$0x1]
        %s213 = scalar_lea.vmem %s2, %s209
        %v214 = vld [vmem:[%s213] sm:$0x1]
        %v215 = vrot.slane %v207, 4
        %v216 = vmax.f32 %v207, %v215
        %v217 = vrot.slane %v216, 2
        %v218 = vmax.f32 %v216, %v217
        %v219 = vrot.slane %v218, 1
        %v220 = vmax.f32 %v218, %v219
        %v221 = vsub.f32 %v207, %v220
        %v222 = vmul.f32 %v221, 1.442695
        %v223 = vpow.pop %v222
        %v224 = vrot.slane %v223, 4
        %v225 = vadd.f32 %v223, %v224
        %v226 = vrot.slane %v225, 2
        %v227 = vadd.f32 %v225, %v226
        %v228 = vrot.slane %v227, 1
        %v229 = vadd.f32 %v227, %v228
        %v230 = vlaneseq
        %v231 = vshrl.u32 %v230, 7
        %v232 = vlaneseq
        %v233 = vshrl.u32 %v232, 7
        %v234 = vsub.s32 0, %v233
        %v235 = vrot.slane %v212, %v234
        %vm236 = vcmp.eq.s32.totalorder %v231, %v235
        %v237 = vsel %vm236, %v221, 0.0
        %v238 = vrot.slane %v237, 4
        %v239 = vadd.f32 %v237, %v238
        %v240 = vrot.slane %v239, 2
        %v241 = vadd.f32 %v239, %v240
        %v242 = vrot.slane %v241, 1
        %v243 = vadd.f32 %v241, %v242
        %v244 = vlog2.pop %v229
        %v245 = vmul.f32 %v244, 0.6931472
        %v246 = vsub.f32 %v245, %v243
        %v247 = vstv %s24
        %vm248 = vcmp.eq.s32.totalorder %v214, %v247
        %v249 = vld [vmem:[#allocation2] sm:$0x1]
        %v250 = vsel %vm248, %v246, 0.0
        %v251 = vadd.f32 %v249, %v250
        %252 = vst [vmem:[#allocation2] sm:$0x1] %v251
        %v253 = vld [vmem:[#allocation3] sm:$0x1]
        %v254 = vsel %vm248, 1.0, 0.0
        %v255 = vadd.f32 %v253, %v254
        %256 = vst [vmem:[#allocation3] sm:$0x1] %v255
        // Predicated region
        $region41: #{tpu_custom_call.1} parent=31 // pred_check
          %p257 = pneg %p201
        $region42: #{tpu_custom_call.1} parent=31 // pred_check_branch
          %259 = sbr.rel (%p257) target = $region44
        $region43: #{tpu_custom_call.1} parent=31 // pred_region
          %v260 = vld [vmem:[#allocation2] sm:$0x1]
          %vm261 = vcmask 1040384
          %v262 = vsel %vm261, %v260, 0.0
          %263 = vadd.xlane.f32.xlu0 %v262
          %v264 = vpop.xlane.xlu0 %263
          %v265 = vrot.slane %v264, 4
          %v266 = vadd.f32 %v264, %v265
          %v267 = vrot.slane %v266, 2
          %v268 = vadd.f32 %v266, %v267
          %v269 = vrot.slane %v268, 1
          %v270 = vadd.f32 %v268, %v269
          %s271 = vtos %v270
          %v272 = vld [vmem:[#allocation3] sm:$0x1]
          %v273 = vsel %vm261, %v272, 0.0
          %274 = vadd.xlane.f32.xlu0 %v273
          %v275 = vpop.xlane.xlu0 %274
          %v276 = vrot.slane %v275, 4
          %v277 = vadd.f32 %v275, %v276
          %v278 = vrot.slane %v277, 2
          %v279 = vadd.f32 %v277, %v278
          %v280 = vrot.slane %v279, 1
          %v281 = vadd.f32 %v279, %v280
          %s282 = vtos %v281
          %v283 = vlaneseq
          %v284 = vand.u32 %v283, 127
          %vm285 = vcmp.eq.s32.totalorder %v231, 0
          %vm286 = vcmp.eq.s32.totalorder %v284, 0
          %vm287 = vmand %vm285, %vm286
          %vm288 = vcmp.eq.s32.totalorder %v284, 1
          %vm289 = vmand %vm285, %vm288
          %v290 = vstv %s282
          %v291 = vsel %vm289, %v290, 0.0
          %v292 = vstv %s271
          %v293 = vsel %vm287, %v292, %v291
          %294 = vst [vmem:[%s200] sm:$0xff] %v293
        $region44: #{tpu_custom_call.1} parent=31 // pred_fallthru
          _
        %s295 = sand.u32 %s110, 1
        %s296 = scalar_lea.sflag [#allocation6], %s295
        %s297 = sand.u32 %s110, 1
        %s298 = smul.addr %s297, 8
        %s299 = scalar_lea.vmem [#allocation7], %s298
        // Predicated region
        $region45: #{tpu_custom_call.1} parent=31 // pred_check
          %p300 = pneg %p120
        $region46: #{tpu_custom_call.1} parent=31 // pred_check_branch
          %302 = sbr.rel (%p300) target = $region48
        $region47: #{tpu_custom_call.1} parent=31 // pred_region
          %s304 = ssub.s32 128, 128
          %305 = vsyncadd %s296, %s304
          %s306 = smul.addr %s24, 128
          %s307 = scalar_lea.hbm %s3, %s306
          %s309 = sshll.u32 %s299, 4
          %s310 = int_to_ptr.vmem [resolvable:$true] %s309
          %312 = dma.vmem_to_hbm [thread:$0]  %s310, 128, %s307, %s296
        $region48: #{tpu_custom_call.1} parent=31 // pred_fallthru
          _
      $region32: #{tpu_custom_call.1} parent=5 // pred_fallthru
        _
      %p313 = scmp.le.s32.totalorder 2, %s15
      // Predicated region
      $region49: #{tpu_custom_call.1} parent=5 // pred_check
        %p314 = pneg %p313
      $region50: #{tpu_custom_call.1} parent=5 // pred_check_branch
        %316 = sbr.rel (%p314) target = $region52
      $region51: #{tpu_custom_call.1} parent=5 // pred_region
        %s317 = ssub.s32 %s15, 2
        // Predicated region
        $region53: #{tpu_custom_call.1} parent=51 // pred_check
          %p318 = pneg %p126
        $region54: #{tpu_custom_call.1} parent=51 // pred_check_branch
          %320 = sbr.rel (%p318) target = $region56
        $region55: #{tpu_custom_call.1} parent=51 // pred_region
          %s321 = sand.u32 %s111, 1
          %s322 = scalar_lea.sflag [#allocation6], %s321
          %s323 = sand.u32 %s111, 1
          %s324 = smul.addr %s323, 8
          %s325 = scalar_lea.vmem [#allocation7], %s324
          %326 = dma.done %s322, 128
        $region56: #{tpu_custom_call.1} parent=51 // pred_fallthru
          _
      $region52: #{tpu_custom_call.1} parent=5 // pred_fallthru
        _
    $region6: #{tpu_custom_call.1} parent=1 // loop_footer
      %s19 = sadd.s32 1, %s15
    $region7: #{tpu_custom_call.1} parent=1 // loop_footer_branch
      %14 = sbr.rel target = $region3
    $region8: #{tpu_custom_call.1} parent=1 // loop_exit
      _
    %327 = vsyncpa [#allocation5], 1
    %s328 = scalar_lea.sflag [#allocation5], 1
    %329 = vsyncpa %s328, 1
    %330 = vsyncpa [#allocation6], 1
    %s331 = scalar_lea.sflag [#allocation6], 1
    %332 = vsyncpa %s331, 1

</llo_original>
